<compile_context>
chip_gen: v6e
topology: v6e:2x2x1
jax: 0.10.0
libtpu: 0.0.40
codegen_flags: <defaults>
</compile_context>

<pallas_src>
import functools
import math

import numpy as np
import jax
import jax.numpy as jnp
from jax.experimental import pallas as pl
from jax.experimental.pallas import tpu as pltpu


# ----------------------------------------------------------------------------
# Host-side construction of the positional-encoding buffer (trace-time const).
# ----------------------------------------------------------------------------
def make_positional_encoding_table(d_model, max_len=5000):
    """(max_len, d_model) float32 sinusoid table, identical to the PyTorch buffer."""
    position = np.arange(max_len, dtype=np.float32)[:, None]            # (L, 1)
    div_term = np.exp(np.arange(0, d_model, 2, dtype=np.float32)
                      * (-math.log(10000.0) / d_model))                 # (D/2,)
    pe = np.zeros((max_len, d_model), dtype=np.float32)
    pe[:, 0::2] = np.sin(position * div_term)
    pe[:, 1::2] = np.cos(position * div_term)
    return jnp.asarray(pe)


# ----------------------------------------------------------------------------
# Kernels
# ----------------------------------------------------------------------------
def _pe_add_kernel(x_ref, pe_ref, o_ref):
    # x_ref: (TS, B, D), pe_ref: (TS, 1, D) -> broadcast add over batch (sublanes)
    o_ref[...] = (x_ref[...] + pe_ref[...]).astype(o_ref.dtype)


def _pe_add_dropout_kernel(seed_ref, x_ref, pe_ref, o_ref, *, rate):
    # Training-mode dropout (inverted scaling).  Seeded per grid step so the
    # result is deterministic regardless of how steps shard across cores.
    pltpu.prng_seed(seed_ref[0] + pl.program_id(0))
    y = x_ref[...] + pe_ref[...]
    bits = pltpu.bitcast(pltpu.prng_random_bits(y.shape), jnp.uint32)
    uniform = (bits >> 8).astype(jnp.float32) * (1.0 / (1 << 24))
    keep = uniform >= rate
    o_ref[...] = jnp.where(keep, y * (1.0 / (1.0 - rate)), 0.0).astype(o_ref.dtype)


# ----------------------------------------------------------------------------
# Wrapper
# ----------------------------------------------------------------------------
def positional_encoding_forward(x, pe_table, *, dropout_rate=0.1,
                                deterministic=True, seed=0, block_seq=None):
    """x: (S, B, D) float; pe_table: (max_len, D) float32."""
    S, B, D = x.shape
    assert pe_table.shape[0] >= S and pe_table.shape[1] == D

    # Slice the buffer to the used sequence length and add the broadcast batch
    # axis once at trace time (so the kernel does a plain broadcast add).
    pe_s = pe_table[:S].reshape(S, 1, D)

    # Tile only over the sequence axis.  Batch/channel stay full so the block
    # constraint (last two dims == full array dims) is always satisfied and the
    # channel axis stays lane-dense.  Multiple-of-8 tile when actually tiling.
    if block_seq is None:
        block_seq = S if S <= 512 else 512
    ts = min(block_seq, S)
    grid = (pl.cdiv(S, ts),)

    x_spec = pl.BlockSpec((ts, B, D), lambda i: (i, 0, 0))
    pe_spec = pl.BlockSpec((ts, 1, D), lambda i: (i, 0, 0))
    out_spec = pl.BlockSpec((ts, B, D), lambda i: (i, 0, 0))
    out_shape = jax.ShapeDtypeStruct((S, B, D), x.dtype)
    cparams = pltpu.CompilerParams(dimension_semantics=("parallel",))

    if deterministic or dropout_rate == 0.0:
        # Eval-mode forward: dropout is the identity.
        return pl.pallas_call(
            _pe_add_kernel,
            out_shape=out_shape,
            grid=grid,
            in_specs=[x_spec, pe_spec],
            out_specs=out_spec,
            compiler_params=cparams,
        )(x, pe_s)

    # Training-mode forward with in-kernel dropout (seed scalar lives in SMEM).
    seed_arr = jnp.asarray([seed], dtype=jnp.int32)
    kernel = functools.partial(_pe_add_dropout_kernel, rate=float(dropout_rate))
    return pl.pallas_call(
        kernel,
        out_shape=out_shape,
        grid=grid,
        in_specs=[pl.BlockSpec(memory_space=pltpu.MemorySpace.SMEM),
                  x_spec, pe_spec],
        out_specs=out_spec,
        compiler_params=cparams,
    )(seed_arr, x, pe_s)


# ----------------------------------------------------------------------------
# Demo / self-check
# ----------------------------------------------------------------------------
if __name__ == "__main__":
    key = jax.random.PRNGKey(0)
    seq_len, batch, d_model = 8, 2, 32
    max_len = 5000

    pe_table = make_positional_encoding_table(d_model, max_len)
    x = jax.random.normal(key, (seq_len, batch, d_model), dtype=jnp.float32)

    # Eval-mode forward (dropout = identity), matching module.eval() semantics.
    # TODO(synk): training-mode dropout path (_pe_add_dropout_kernel) is
    # implemented but not exercised here since it has no deterministic reference.
    out = positional_encoding_forward(x, pe_table, dropout_rate=0.1,
                                      deterministic=True)
    out = jax.block_until_ready(out)

    ref = x + pe_table[:seq_len][:, None, :]
    assert out.shape == (seq_len, batch, d_model)
    assert jnp.allclose(out, ref, atol=1e-6, rtol=1e-6)

    print("KERNEL_OK")
</pallas_src>

<mosaic_0001>
module attributes {stable_mosaic.version = 11 : i64} {
  func.func @_pe_add_kernel(%arg0: i32, %arg1: memref<8x2x32xf32, #tpu.memory_space<vmem>>, %arg2: memref<8x1x32xf32, #tpu.memory_space<vmem>>, %arg3: memref<8x2x32xf32, #tpu.memory_space<vmem>>) attributes {dimension_semantics = [#tpu.dimension_semantics<parallel>], iteration_bounds = array<i64: 1>, scalar_prefetch = 0 : i64, scratch_operands = 0 : i64, tpu.core_type = #tpu.core_type<tc>, window_params = [{transform_indices = @transform_0, window_bounds = array<i64: 8, 2, 32>}, {transform_indices = @transform_1, window_bounds = array<i64: 8, 1, 32>}, {transform_indices = @transform_2, window_bounds = array<i64: 8, 2, 32>}]} {
    %c0 = arith.constant 0 : index
    %c0_0 = arith.constant 0 : index
    %c0_1 = arith.constant 0 : index
    %0 = vector.load %arg1[%c0, %c0_0, %c0_1] : memref<8x2x32xf32, #tpu.memory_space<vmem>>, vector<8x2x32xf32>
    %c0_2 = arith.constant 0 : index
    %c0_3 = arith.constant 0 : index
    %c0_4 = arith.constant 0 : index
    %1 = vector.load %arg2[%c0_2, %c0_3, %c0_4] : memref<8x1x32xf32, #tpu.memory_space<vmem>>, vector<8x1x32xf32>
    %2 = vector.broadcast %1 : vector<8x1x32xf32> to vector<8x2x32xf32>
    %3 = arith.addf %0, %2 : vector<8x2x32xf32>
    %c0_5 = arith.constant 0 : index
    %c0_6 = arith.constant 0 : index
    %c0_7 = arith.constant 0 : index
    %4 = vector.load %arg3[%c0_5, %c0_6, %c0_7] : memref<8x2x32xf32, #tpu.memory_space<vmem>>, vector<8x2x32xf32>
    tpu.vector_store %arg3[%c0_5, %c0_6, %c0_7], %3 {strides = array<i32>} : memref<8x2x32xf32, #tpu.memory_space<vmem>>, vector<8x2x32xf32>,
    return
  }
  func.func @transform_0(%arg0: i32) -> (i32, i32, i32) {
    %c0_i32 = arith.constant 0 : i32
    %c0_i32_0 = arith.constant 0 : i32
    %c0_i32_1 = arith.constant 0 : i32
    return %arg0, %c0_i32, %c0_i32_0 : i32, i32, i32
  }
  func.func @transform_1(%arg0: i32) -> (i32, i32, i32) {
    %c0_i32 = arith.constant 0 : i32
    %c0_i32_0 = arith.constant 0 : i32
    %c0_i32_1 = arith.constant 0 : i32
    return %arg0, %c0_i32, %c0_i32_0 : i32, i32, i32
  }
  func.func @transform_2(%arg0: i32) -> (i32, i32, i32) {
    %c0_i32 = arith.constant 0 : i32
    %c0_i32_0 = arith.constant 0 : i32
    %c0_i32_1 = arith.constant 0 : i32
    return %arg0, %c0_i32, %c0_i32_0 : i32, i32, i32
  }
}

</mosaic_0001>

<llo_original>
// kernel: tpu_custom_call.1
$region0: #{tpu_custom_call.1}
  #allocation0 [shape = 'u32[]', space=smem, size = 0x4, offset = 0x4, fixed_abs, tag = 'smem constant byte address 0x4 - core index']
  #allocation1 [shape = 'u32[144,128]{1,0:T(1,128)}', space=vmem, size = 0x12000, scoped, tag = 'internal scratch']
  %s0 = inlined_call_operand.hbm [shape: f32[8,2,32], index: 0, kind: input, shape index: {}]
  %s1 = inlined_call_operand.hbm [shape: f32[8,1,32], index: 1, kind: input, shape index: {}]
  %s2 = inlined_call_operand.hbm [shape: f32[8,2,32], index: 2, kind: output, shape index: {}]
  %s3 = sld [smem:[#allocation0]]
  $region26: #{tpu_custom_call.1} parent=0
    _
  %s5 = ssub.s32 1, %s3
  %s6 = scalar_select 0, %s5, %s3
  $region1: #{tpu_custom_call.1} parent=0
    #allocation2 [shape = 'u8[8192]{0}', space=vmem, size = 0x2000, scoped, tag = 'input window, operand 0, single buffered']
    #allocation3 [shape = 's32[1]{0}', space=sflag, size = 0x4, scoped, tag = 'scoped memory for tpu_custom_call.1']
    #allocation4 [shape = 's32[1]{0}', space=sflag, size = 0x4, scoped, tag = 'scoped memory for tpu_custom_call.1']
    #allocation5 [shape = 'u8[4096]{0}', space=vmem, size = 0x1000, scoped, tag = 'input window, operand 1, single buffered']
    #allocation6 [shape = 's32[1]{0}', space=sflag, size = 0x4, scoped, tag = 'scoped memory for tpu_custom_call.1']
    #allocation7 [shape = 'u8[8192]{0}', space=vmem, size = 0x2000, scoped, tag = 'output window, operand 0, single buffered']
    %7 = vsyncpa [#allocation3], 0
    %8 = vsyncpa [#allocation6], 0
    %9 = vsyncpa [#allocation4], 0
    // Predicated region
    $region2: #{tpu_custom_call.1} parent=1 // pred_check
      _
    $region3: #{tpu_custom_call.1} parent=1 // pred_check_branch
      %11 = sbr.rel (0) target = $region5
    $region4: #{tpu_custom_call.1} parent=1 // pred_region
      %s13 = ssub.s32 256, 256
      %14 = vsyncadd [#allocation3], %s13
      %s15 = sshll.u32 [#allocation2], 4
      %s16 = int_to_ptr.vmem [resolvable:$true] %s15
      %21 = dma.hbm_to_vmem [thread:$0]  %s0, 256, %s16, [#allocation3], 32, 32, 2
    $region5: #{tpu_custom_call.1} parent=1 // pred_fallthru
      _
    // Predicated region
    $region6: #{tpu_custom_call.1} parent=1 // pred_check
      _
    $region7: #{tpu_custom_call.1} parent=1 // pred_check_branch
      %23 = sbr.rel (0) target = $region9
    $region8: #{tpu_custom_call.1} parent=1 // pred_region
      %s25 = ssub.s32 128, 128
      %26 = vsyncadd [#allocation6], %s25
      %s27 = sshll.u32 [#allocation5], 4
      %s28 = int_to_ptr.vmem [resolvable:$true] %s27
      %33 = dma.hbm_to_vmem [thread:$0]  %s1, 128, %s28, [#allocation6], 16, 16, 1
    $region9: #{tpu_custom_call.1} parent=1 // pred_fallthru
      _
    // Predicated region
    $region10: #{tpu_custom_call.1} parent=1 // pred_check
      _
    $region11: #{tpu_custom_call.1} parent=1 // pred_check_branch
      %35 = sbr.rel (0) target = $region13
    $region12: #{tpu_custom_call.1} parent=1 // pred_region
      %36 = dma.done [#allocation3], 256
    $region13: #{tpu_custom_call.1} parent=1 // pred_fallthru
      _
    // Predicated region
    $region14: #{tpu_custom_call.1} parent=1 // pred_check
      _
    $region15: #{tpu_custom_call.1} parent=1 // pred_check_branch
      %38 = sbr.rel (0) target = $region17
    $region16: #{tpu_custom_call.1} parent=1 // pred_region
      %39 = dma.done [#allocation6], 128
    $region17: #{tpu_custom_call.1} parent=1 // pred_fallthru
      _
    %v40 = vld [vmem:[#allocation2] sm:$0x3]
    %v41 = vld [vmem:[#allocation2 + $0x2] sm:$0x3]
    %v42 = vld [vmem:[#allocation2 + $0x4] sm:$0x3]
    %v43 = vld [vmem:[#allocation2 + $0x6] sm:$0x3]
    %v44 = vld [vmem:[#allocation2 + $0x8] sm:$0x3]
    %v45 = vld [vmem:[#allocation2 + $0xa] sm:$0x3]
    %v46 = vld [vmem:[#allocation2 + $0xc] sm:$0x3]
    %v47 = vld [vmem:[#allocation2 + $0xe] sm:$0x3]
    %v48 = vld [vmem:[#allocation5] sm:$0x1]
    %v49 = vld [vmem:[#allocation5 + $0x1] sm:$0x1]
    %v50 = vld [vmem:[#allocation5 + $0x2] sm:$0x1]
    %v51 = vld [vmem:[#allocation5 + $0x3] sm:$0x1]
    %v52 = vld [vmem:[#allocation5 + $0x4] sm:$0x1]
    %v53 = vld [vmem:[#allocation5 + $0x5] sm:$0x1]
    %v54 = vld [vmem:[#allocation5 + $0x6] sm:$0x1]
    %v55 = vld [vmem:[#allocation5 + $0x7] sm:$0x1]
    %v64 = vlaneseq
    %v65 = vshrl.u32 %v64, 7
    %v66 = vsub.s32 0, %v65
    %v67 = vrot.slane %v48, %v66
    %v68 = vlaneseq
    %v69 = vshrl.u32 %v68, 7
    %v70 = vsub.s32 0, %v69
    %v71 = vrot.slane %v49, %v70
    %v72 = vlaneseq
    %v73 = vshrl.u32 %v72, 7
    %v74 = vsub.s32 0, %v73
    %v75 = vrot.slane %v50, %v74
    %v76 = vlaneseq
    %v77 = vshrl.u32 %v76, 7
    %v78 = vsub.s32 0, %v77
    %v79 = vrot.slane %v51, %v78
    %v80 = vlaneseq
    %v81 = vshrl.u32 %v80, 7
    %v82 = vsub.s32 0, %v81
    %v83 = vrot.slane %v52, %v82
    %v84 = vlaneseq
    %v85 = vshrl.u32 %v84, 7
    %v86 = vsub.s32 0, %v85
    %v87 = vrot.slane %v53, %v86
    %v88 = vlaneseq
    %v89 = vshrl.u32 %v88, 7
    %v90 = vsub.s32 0, %v89
    %v91 = vrot.slane %v54, %v90
    %v92 = vlaneseq
    %v93 = vshrl.u32 %v92, 7
    %v94 = vsub.s32 0, %v93
    %v95 = vrot.slane %v55, %v94
    %v104 = vadd.f32 %v40, %v67
    %v105 = vadd.f32 %v41, %v71
    %v106 = vadd.f32 %v42, %v75
    %v107 = vadd.f32 %v43, %v79
    %v108 = vadd.f32 %v44, %v83
    %v109 = vadd.f32 %v45, %v87
    %v110 = vadd.f32 %v46, %v91
    %v111 = vadd.f32 %v47, %v95
    %vm112 = vcmask 254976
    %113 = vst.msk [vmem:[#allocation7] sm:$0x3] %vm112, %v104
    %114 = vst.msk [vmem:[#allocation7 + $0x2] sm:$0x3] %vm112, %v105
    %115 = vst.msk [vmem:[#allocation7 + $0x4] sm:$0x3] %vm112, %v106
    %116 = vst.msk [vmem:[#allocation7 + $0x6] sm:$0x3] %vm112, %v107
    %117 = vst.msk [vmem:[#allocation7 + $0x8] sm:$0x3] %vm112, %v108
    %118 = vst.msk [vmem:[#allocation7 + $0xa] sm:$0x3] %vm112, %v109
    %119 = vst.msk [vmem:[#allocation7 + $0xc] sm:$0x3] %vm112, %v110
    %120 = vst.msk [vmem:[#allocation7 + $0xe] sm:$0x3] %vm112, %v111
    // Predicated region
    $region18: #{tpu_custom_call.1} parent=1 // pred_check
      _
    $region19: #{tpu_custom_call.1} parent=1 // pred_check_branch
      %122 = sbr.rel (0) target = $region21
    $region20: #{tpu_custom_call.1} parent=1 // pred_region
      %s124 = ssub.s32 256, 256
      %125 = vsyncadd [#allocation4], %s124
      %s126 = sshll.u32 [#allocation7], 4
      %s127 = int_to_ptr.vmem [resolvable:$true] %s126
      %132 = dma.vmem_to_hbm [thread:$0]  %s127, 256, %s2, [#allocation4], 32, 32, 2
    $region21: #{tpu_custom_call.1} parent=1 // pred_fallthru
      _
    // Predicated region
    $region22: #{tpu_custom_call.1} parent=1 // pred_check
      _
    $region23: #{tpu_custom_call.1} parent=1 // pred_check_branch
      %134 = sbr.rel (0) target = $region25
    $region24: #{tpu_custom_call.1} parent=1 // pred_region
      %135 = dma.done [#allocation4], 256
    $region25: #{tpu_custom_call.1} parent=1 // pred_fallthru
      _
    %136 = vsyncpa [#allocation3], 1
    %137 = vsyncpa [#allocation6], 1
    %138 = vsyncpa [#allocation4], 1

</llo_original>
